<compile_context>
chip_gen: v5e
topology: v5e:2x2
jax: 0.10.0
libtpu: 0.0.40
codegen_flags: <defaults>
</compile_context>

<pallas_src>
import functools

import jax
import jax.numpy as jnp
from jax.experimental import pallas as pl
from jax.experimental.pallas import tpu as pltpu


def _spline_fwd_kernel(t_ref, table_ref, out_ref, *,
                       factor, inv_factor, t0, n_bins):
    tv = t_ref[...]                                        # (1, TN) f32, points on lanes
    idx = jnp.floor(factor * tv).astype(jnp.int32)
    idx = jnp.clip(idx, 0, n_bins - 1)                     # clamp (last-knot / OOB fix)

    # uniform grid -> knot position is affine in the bin index (no gather)
    f = tv - (t0 + idx.astype(jnp.float32) * inv_factor)   # fractional part, (1, TN)

    # one-hot over bins; bins on the sublane axis, queries stay on lanes
    rows = jax.lax.broadcasted_iota(jnp.int32, (n_bins, tv.shape[1]), 0)
    onehot = (rows == idx).astype(jnp.float32)             # (n_bins, TN)

    # powers-weighted one-hot, stacked along sublanes: [f^0; f^1; f^2; f^3]
    f2 = f * f
    m = jnp.concatenate(
        [onehot, onehot * f, onehot * f2, onehot * (f2 * f)], axis=0)  # (4*n_bins, TN)

    # single MXU matmul: (basis, 4*n_bins) @ (4*n_bins, TN) -> (basis, TN)
    out_ref[...] = jnp.dot(table_ref[...], m,
                           preferred_element_type=jnp.float32
                           ).astype(out_ref.dtype)


class NaturalCubicSpline:
    """JAX/Pallas port of mlcg.nn.spline.NaturalCubicSpline (forward only)."""

    def __init__(self, coeffs, tile_n=2048, out_dtype=jnp.float32):
        t, a, b, c, d = coeffs
        self._t = jnp.asarray(t, jnp.float32)
        a = jnp.asarray(a, jnp.float32)
        b = jnp.asarray(b, jnp.float32)
        c = jnp.asarray(c, jnp.float32)
        d = jnp.asarray(d, jnp.float32)
        self.n_bins = int(a.shape[0])
        self.basis = int(a.shape[-1])
        rng = float(self._t[-1] - self._t[0])
        self.factor = self.n_bins / rng          # bins per unit of t
        self.inv_factor = rng / self.n_bins      # bin width
        self.t0 = float(self._t[0])
        # fused coefficient table, transposed: (basis, 4*n_bins);
        # column blocks are [a | b | c | d] matching the powers-weighted one-hot.
        self._table_t = jnp.concatenate([a, b, c, d], axis=0).T
        self.tile_n = int(tile_n)
        # bf16 output is a further ~2x HBM-write saving on v6e/v7x; keep f32 by default.
        self.out_dtype = out_dtype

    def __len__(self):
        return self.basis

    def forward(self, t):
        t = jnp.asarray(t, jnp.float32)
        n = t.shape[0]
        # biggest lane-aligned tile <= tile_n; large n keeps >= 2 grid steps (v7x)
        tile = max(128, min(self.tile_n, 128 * pl.cdiv(n, 128)))
        grid = pl.cdiv(n, tile)
        n_pad = grid * tile

        # query points on the lane axis
        t_row = jnp.zeros((1, n_pad), jnp.float32).at[0, :n].set(t)

        kernel = functools.partial(
            _spline_fwd_kernel, factor=self.factor, inv_factor=self.inv_factor,
            t0=self.t0, n_bins=self.n_bins)

        out_t = pl.pallas_call(
            kernel,
            out_shape=jax.ShapeDtypeStruct((self.basis, n_pad), self.out_dtype),
            grid_spec=pltpu.PrefetchScalarGridSpec(
                num_scalar_prefetch=0,
                grid=(grid,),
                in_specs=[
                    pl.BlockSpec((1, tile), lambda i: (0, i)),                      # t
                    pl.BlockSpec((self.basis, 4 * self.n_bins), lambda i: (0, 0)),  # fused table
                ],
                out_specs=pl.BlockSpec((self.basis, tile), lambda i: (0, i)),
            ),
            compiler_params=pltpu.CompilerParams(
                dimension_semantics=("parallel",)),
        )(t_row, self._table_t)

        # back to the (n, basis) layout of the PyTorch module
        return out_t[:, :n].T

    __call__ = forward


def _reference_forward(t_knots, a, b, c, d, t):
    """Pure-JAX reference matching the PyTorch forward exactly."""
    factor = (t_knots.shape[0] - 1) / (t_knots[-1] - t_knots[0])
    index = jnp.floor(factor * t).astype(jnp.int32)
    frac = (t - t_knots[index])[:, None]
    inner = c[index] + d[index] * frac
    inner = b[index] + inner * frac
    return a[index] + inner * frac


if __name__ == "__main__":
    key = jax.random.PRNGKey(0)
    k_a, k_b, k_c, k_d, k_t = jax.random.split(key, 5)

    n_knots = 17            # -> 16 bins
    basis = 32              # number of spline functions
    n_points = 200          # query points (non-multiple of 128 -> exercises padding)

    # deterministic synthetic coefficients (coeffs = [t, a, b, c, d])
    t_knots = jnp.linspace(0.0, 1.0, n_knots, dtype=jnp.float32)
    a = jax.random.normal(k_a, (n_knots - 1, basis), jnp.float32)
    b = jax.random.normal(k_b, (n_knots - 1, basis), jnp.float32)
    c = jax.random.normal(k_c, (n_knots - 1, basis), jnp.float32)
    d = jax.random.normal(k_d, (n_knots - 1, basis), jnp.float32)

    # query points strictly inside [t0, t_last) so reference indexing is in range
    t_query = jax.random.uniform(k_t, (n_points,), jnp.float32,
                                 minval=0.0, maxval=0.999)

    spline = NaturalCubicSpline([t_knots, a, b, c, d])

    out = spline(t_query)
    out = jax.block_until_ready(out)

    ref = _reference_forward(t_knots, a, b, c, d, t_query)
    assert out.shape == (n_points, basis), out.shape
    assert jnp.allclose(out, ref, atol=1e-5, rtol=1e-5), \
        float(jnp.max(jnp.abs(out - ref)))

    print("KERNEL_OK")
</pallas_src>

<mosaic_0001>
module attributes {stable_mosaic.version = 11 : i64} {
  func.func @_spline_fwd_kernel(%arg0: i32, %arg1: memref<1x256xf32, #tpu.memory_space<vmem>>, %arg2: memref<32x64xf32, #tpu.memory_space<vmem>>, %arg3: memref<32x256xf32, #tpu.memory_space<vmem>>) attributes {dimension_semantics = [#tpu.dimension_semantics<parallel>], iteration_bounds = array<i64: 1>, scalar_prefetch = 0 : i64, scratch_operands = 0 : i64, tpu.core_type = #tpu.core_type<tc>, window_params = [{transform_indices = @transform_0, window_bounds = array<i64: 1, 256>}, {pipeline_mode = #tpu.pipeline_mode<synchronous>, transform_indices = @transform_1, window_bounds = array<i64: 32, 64>}, {transform_indices = @transform_2, window_bounds = array<i64: 32, 256>}]} {
    %c0 = arith.constant 0 : index
    %c0_0 = arith.constant 0 : index
    %0 = vector.load %arg1[%c0, %c0_0] : memref<1x256xf32, #tpu.memory_space<vmem>>, vector<1x256xf32>
    %cst = arith.constant 1.600000e+01 : f32
    %1 = vector.broadcast %cst : f32 to vector<1x256xf32>
    %2 = arith.mulf %1, %0 : vector<1x256xf32>
    %3 = math.floor %2 : vector<1x256xf32>
    %4 = arith.fptosi %3 : vector<1x256xf32> to vector<1x256xi32>
    %c0_i32 = arith.constant 0 : i32
    %c15_i32 = arith.constant 15 : i32
    %5 = vector.broadcast %c0_i32 : i32 to vector<1x256xi32>
    %6 = arith.maxsi %5, %4 : vector<1x256xi32>
    %7 = vector.broadcast %c15_i32 : i32 to vector<1x256xi32>
    %8 = arith.minsi %7, %6 : vector<1x256xi32>
    %9 = arith.sitofp %8 : vector<1x256xi32> to vector<1x256xf32>
    %cst_1 = arith.constant 6.250000e-02 : f32
    %10 = vector.broadcast %cst_1 : f32 to vector<1x256xf32>
    %11 = arith.mulf %9, %10 : vector<1x256xf32>
    %cst_2 = arith.constant 0.000000e+00 : f32
    %12 = vector.broadcast %cst_2 : f32 to vector<1x256xf32>
    %13 = arith.addf %12, %11 : vector<1x256xf32>
    %14 = arith.subf %0, %13 : vector<1x256xf32>
    %15 = tpu.iota {dimensions = array<i32: 0>} : vector<16x256xi32>
    %16 = vector.broadcast %8 : vector<1x256xi32> to vector<16x256xi32>
    %17 = arith.cmpi eq, %15, %16 : vector<16x256xi32>
    %18 = arith.extui %17 : vector<16x256xi1> to vector<16x256xi32>
    %19 = arith.sitofp %18 : vector<16x256xi32> to vector<16x256xf32>
    %20 = arith.mulf %14, %14 : vector<1x256xf32>
    %21 = vector.broadcast %14 : vector<1x256xf32> to vector<16x256xf32>
    %22 = arith.mulf %19, %21 : vector<16x256xf32>
    %23 = vector.broadcast %20 : vector<1x256xf32> to vector<16x256xf32>
    %24 = arith.mulf %19, %23 : vector<16x256xf32>
    %25 = arith.mulf %20, %14 : vector<1x256xf32>
    %26 = vector.broadcast %25 : vector<1x256xf32> to vector<16x256xf32>
    %27 = arith.mulf %19, %26 : vector<16x256xf32>
    %28 = tpu.concatenate %19, %22, %24, %27 in 0 : vector<16x256xf32>, vector<16x256xf32>, vector<16x256xf32>, vector<16x256xf32> -> vector<64x256xf32>
    %c0_3 = arith.constant 0 : index
    %c0_4 = arith.constant 0 : index
    %29 = vector.load %arg2[%c0_3, %c0_4] : memref<32x64xf32, #tpu.memory_space<vmem>>, vector<32x64xf32>
    %cst_5 = arith.constant dense<0.000000e+00> : vector<32x256xf32>
    %30 = tpu.matmul %29, %28, %cst_5 {dimension_numbers = #tpu.dot_dimension_numbers<[1], [0], [0], [1], [0, 0, 1, 1], [], []>} : vector<32x64xf32>, vector<64x256xf32>, vector<32x256xf32> -> vector<32x256xf32>
    %c0_6 = arith.constant 0 : index
    %c0_7 = arith.constant 0 : index
    %31 = vector.load %arg3[%c0_6, %c0_7] : memref<32x256xf32, #tpu.memory_space<vmem>>, vector<32x256xf32>
    tpu.vector_store %arg3[%c0_6, %c0_7], %30 {strides = array<i32>} : memref<32x256xf32, #tpu.memory_space<vmem>>, vector<32x256xf32>,
    return
  }
  func.func @transform_0(%arg0: i32) -> (i32, i32) {
    %c0_i32 = arith.constant 0 : i32
    %c0_i32_0 = arith.constant 0 : i32
    return %c0_i32, %arg0 : i32, i32
  }
  func.func @transform_1(%arg0: i32) -> (i32, i32) {
    %c0_i32 = arith.constant 0 : i32
    %c0_i32_0 = arith.constant 0 : i32
    %c0_i32_1 = arith.constant 0 : i32
    return %c0_i32, %c0_i32_0 : i32, i32
  }
  func.func @transform_2(%arg0: i32) -> (i32, i32) {
    %c0_i32 = arith.constant 0 : i32
    %c0_i32_0 = arith.constant 0 : i32
    return %c0_i32, %arg0 : i32, i32
  }
}

</mosaic_0001>

<llo_original>
// kernel: tpu_custom_call.1
$region0: #{tpu_custom_call.1}
  #allocation0 [shape = 'u32[]', space=smem, size = 0x4, offset = 0x4, fixed_abs, tag = 'smem constant byte address 0x4 - core index']
  #allocation1 [shape = 'u32[72,128]{1,0:T(1,128)}', space=vmem, size = 0x9000, scoped, tag = 'internal scratch']
  %s0 = inlined_call_operand.hbm [shape: f32[1,256], index: 0, kind: input, shape index: {}]
  %s1 = inlined_call_operand.hbm [shape: f32[32,64], index: 1, kind: input, shape index: {}]
  %s2 = inlined_call_operand.hbm [shape: f32[32,256], index: 2, kind: output, shape index: {}]
  %s3 = sld [smem:[#allocation0]]
  $region26: #{tpu_custom_call.1} parent=0
    _
  %s5 = ssub.s32 1, %s3
  %s6 = scalar_select 0, %s5, %s3
  $region1: #{tpu_custom_call.1} parent=0
    #allocation2 [shape = 'u8[1024]{0}', space=vmem, size = 0x400, scoped, tag = 'input window, operand 0, single buffered']
    #allocation3 [shape = 's32[1]{0}', space=sflag, size = 0x4, scoped, tag = 'scoped memory for tpu_custom_call.1']
    #allocation4 [shape = 's32[1]{0}', space=sflag, size = 0x4, scoped, tag = 'scoped memory for tpu_custom_call.1']
    #allocation5 [shape = 'u8[16384]{0}', space=vmem, size = 0x4000, scoped, tag = 'input window, operand 1, single buffered']
    #allocation6 [shape = 's32[1]{0}', space=sflag, size = 0x4, scoped, tag = 'scoped memory for tpu_custom_call.1']
    #allocation7 [shape = 'u8[32768]{0}', space=vmem, size = 0x8000, scoped, tag = 'output window, operand 0, single buffered']
    %7 = vsyncpa [#allocation3], 0
    %8 = vsyncpa [#allocation6], 0
    %9 = vsyncpa [#allocation4], 0
    // Predicated region
    $region2: #{tpu_custom_call.1} parent=1 // pred_check
      _
    $region3: #{tpu_custom_call.1} parent=1 // pred_check_branch
      %11 = sbr.rel (0) target = $region5
    $region4: #{tpu_custom_call.1} parent=1 // pred_region
      %13 = vsyncadd [#allocation3], 0
      %s15 = sshll.u32 %s0, 4
      %s16 = int_to_ptr.hbm [resolvable:$true] %s15
      %s17 = sshll.u32 [#allocation2], 4
      %s18 = int_to_ptr.vmem [resolvable:$true] %s17
      %20 = dma.hbm_to_vmem [thread:$0]  %s16, 32, %s18, [#allocation3]
    $region5: #{tpu_custom_call.1} parent=1 // pred_fallthru
      _
    // Predicated region
    $region6: #{tpu_custom_call.1} parent=1 // pred_check
      _
    $region7: #{tpu_custom_call.1} parent=1 // pred_check_branch
      %22 = sbr.rel (0) target = $region9
    $region8: #{tpu_custom_call.1} parent=1 // pred_region
      %24 = vsyncadd [#allocation6], 0
      %s25 = sshll.u32 %s1, 4
      %s26 = int_to_ptr.hbm [resolvable:$true] %s25
      %s27 = sshll.u32 [#allocation5], 4
      %s28 = int_to_ptr.vmem [resolvable:$true] %s27
      %33 = dma.hbm_to_vmem [thread:$0]  %s26, 512, %s28, [#allocation6], 128, 128, 8
    $region9: #{tpu_custom_call.1} parent=1 // pred_fallthru
      _
    // Predicated region
    $region10: #{tpu_custom_call.1} parent=1 // pred_check
      _
    $region11: #{tpu_custom_call.1} parent=1 // pred_check_branch
      %35 = sbr.rel (0) target = $region13
    $region12: #{tpu_custom_call.1} parent=1 // pred_region
      %37 = dma.done [#allocation3], 32
    $region13: #{tpu_custom_call.1} parent=1 // pred_fallthru
      _
    // Predicated region
    $region14: #{tpu_custom_call.1} parent=1 // pred_check
      _
    $region15: #{tpu_custom_call.1} parent=1 // pred_check_branch
      %39 = sbr.rel (0) target = $region17
    $region16: #{tpu_custom_call.1} parent=1 // pred_region
      %41 = dma.done [#allocation6], 512
    $region17: #{tpu_custom_call.1} parent=1 // pred_fallthru
      _
    %v42 = vld [vmem:[#allocation2] sm:$0x3]
    %v43 = vmul.f32 %v42, 16.0
    %v44 = vfloor.f32 %v43
    %v45 = vcvt.f32.s32.to.zero.pseudo %v44
    %vm46 = vcmp.gt.s32.totalorder %v45, 0
    %v47 = vsel %vm46, %v45, 0
    %vm48 = vcmp.lt.s32.totalorder %v47, 15
    %v49 = vsel %vm48, %v47, 15
    %v50 = vcvt.s32.f32 %v49
    %v51 = vmul.f32 %v50, 0.0625
    %v52 = vadd.f32 %v51, 0.0
    %v53 = vsub.f32 %v42, %v52
    %v54 = vlaneseq
    %v55 = vshrl.u32 %v54, 7
    %v56 = vadd.s32 %v55, 8
    %v57 = vperm.slane %v49, 0
    %v58 = vperm.slane %v49, 1
    %vm59 = vcmp.eq.s32.totalorder %v55, %v57
    %vm60 = vcmp.eq.s32.totalorder %v55, %v58
    %vm61 = vcmp.eq.s32.totalorder %v56, %v57
    %vm62 = vcmp.eq.s32.totalorder %v56, %v58
    %v63 = vsel %vm59, 1, 0
    %v64 = vsel %vm60, 1, 0
    %v65 = vsel %vm61, 1, 0
    %v66 = vsel %vm62, 1, 0
    %v67 = vcvt.s32.f32 %v63
    %v68 = vcvt.s32.f32 %v64
    %v69 = vcvt.s32.f32 %v65
    %v70 = vcvt.s32.f32 %v66
    %v71 = vmul.f32 %v53, %v53
    %v73 = vperm.slane %v53, 0
    %v74 = vperm.slane %v53, 1
    %v77 = vmul.f32 %v67, %v73
    %v78 = vmul.f32 %v68, %v74
    %v79 = vmul.f32 %v69, %v73
    %v80 = vmul.f32 %v70, %v74
    %v82 = vperm.slane %v71, 0
    %v83 = vperm.slane %v71, 1
    %v86 = vmul.f32 %v67, %v82
    %v87 = vmul.f32 %v68, %v83
    %v88 = vmul.f32 %v69, %v82
    %v89 = vmul.f32 %v70, %v83
    %v90 = vmul.f32 %v71, %v53
    %v92 = vperm.slane %v90, 0
    %v93 = vperm.slane %v90, 1
    %v96 = vmul.f32 %v67, %v92
    %v97 = vmul.f32 %v68, %v93
    %v98 = vmul.f32 %v69, %v92
    %v99 = vmul.f32 %v70, %v93
    %v100 = vld [vmem:[#allocation5] sm:$0xff]
    %v101 = vld [vmem:[#allocation5 + $0x8] sm:$0xff]
    %v102 = vld [vmem:[#allocation5 + $0x10] sm:$0xff]
    %v103 = vld [vmem:[#allocation5 + $0x18] sm:$0xff]
    %vm104 = vcmask 523264
    %v106 = vsel %vm104, %v100, 0
    %v109 = vsel %vm104, %v101, 0
    %v112 = vsel %vm104, %v102, 0
    %v115 = vsel %vm104, %v103, 0
    %117 = vmatpush.msra.mxu0 0.0
    %118 = vmatpush.msra.mxu0 0.0
    %119 = vmatpush.msra.mxu0 0.0
    %120 = vmatpush.msra.mxu0 0.0
    %121 = vmatpush.msra.mxu0 0.0
    %122 = vmatpush.msra.mxu0 0.0
    %123 = vmatpush.msra.mxu0 0.0
    %124 = vmatpush.msra.mxu0 0.0
    %125 = vmatpush.msra.mxu0 %v98
    %126 = vmatpush.msra.mxu0 %v96
    %127 = vmatpush.msra.mxu0 %v88
    %128 = vmatpush.msra.mxu0 %v86
    %129 = vmatpush.msra.mxu0 %v79
    %130 = vmatpush.msra.mxu0 %v77
    %131 = vmatpush.msra.mxu0 %v69
    %132 = vmatpush.msra.mxu0 %v67
    %133 = vmatmul.f32.gmra.mxu0 %v106
    %v134 = vpop.f32.mrf.mxu0
    %v135 = vadd.f32 0.0, %v134
    %136 = vmatmul.f32.gmra.mxu0 %v109
    %v137 = vpop.f32.mrf.mxu0
    %v138 = vadd.f32 0.0, %v137
    %139 = vmatmul.f32.gmra.mxu0 %v112
    %v140 = vpop.f32.mrf.mxu0
    %v141 = vadd.f32 0.0, %v140
    %142 = vmatmul.f32.gmra.mxu0 %v115
    %v143 = vpop.f32.mrf.mxu0
    %v144 = vadd.f32 0.0, %v143
    %145 = vdwg.mxu0
    %146 = vmatpush.msra.mxu0 0.0
    %147 = vmatpush.msra.mxu0 0.0
    %148 = vmatpush.msra.mxu0 0.0
    %149 = vmatpush.msra.mxu0 0.0
    %150 = vmatpush.msra.mxu0 0.0
    %151 = vmatpush.msra.mxu0 0.0
    %152 = vmatpush.msra.mxu0 0.0
    %153 = vmatpush.msra.mxu0 0.0
    %154 = vmatpush.msra.mxu0 %v99
    %155 = vmatpush.msra.mxu0 %v97
    %156 = vmatpush.msra.mxu0 %v89
    %157 = vmatpush.msra.mxu0 %v87
    %158 = vmatpush.msra.mxu0 %v80
    %159 = vmatpush.msra.mxu0 %v78
    %160 = vmatpush.msra.mxu0 %v70
    %161 = vmatpush.msra.mxu0 %v68
    %162 = vmatmul.f32.gmra.mxu0 %v106
    %v163 = vpop.f32.mrf.mxu0
    %v164 = vadd.f32 0.0, %v163
    %165 = vmatmul.f32.gmra.mxu0 %v109
    %v166 = vpop.f32.mrf.mxu0
    %v167 = vadd.f32 0.0, %v166
    %168 = vmatmul.f32.gmra.mxu0 %v112
    %v169 = vpop.f32.mrf.mxu0
    %v170 = vadd.f32 0.0, %v169
    %171 = vmatmul.f32.gmra.mxu0 %v115
    %v172 = vpop.f32.mrf.mxu0
    %v173 = vadd.f32 0.0, %v172
    %174 = vdwg.mxu0
    %175 = vst [vmem:[#allocation7] sm:$0xff] %v135
    %176 = vst [vmem:[#allocation7 + $0x8] sm:$0xff] %v164
    %177 = vst [vmem:[#allocation7 + $0x10] sm:$0xff] %v138
    %178 = vst [vmem:[#allocation7 + $0x18] sm:$0xff] %v167
    %179 = vst [vmem:[#allocation7 + $0x20] sm:$0xff] %v141
    %180 = vst [vmem:[#allocation7 + $0x28] sm:$0xff] %v170
    %181 = vst [vmem:[#allocation7 + $0x30] sm:$0xff] %v144
    %182 = vst [vmem:[#allocation7 + $0x38] sm:$0xff] %v173
    // Predicated region
    $region18: #{tpu_custom_call.1} parent=1 // pred_check
      _
    $region19: #{tpu_custom_call.1} parent=1 // pred_check_branch
      %184 = sbr.rel (0) target = $region21
    $region20: #{tpu_custom_call.1} parent=1 // pred_region
      %186 = vsyncadd [#allocation4], 0
      %s187 = sshll.u32 [#allocation7], 4
      %s188 = int_to_ptr.vmem [resolvable:$true] %s187
      %s189 = sshll.u32 %s2, 4
      %s190 = int_to_ptr.hbm [resolvable:$true] %s189
      %195 = dma.vmem_to_hbm [thread:$0]  %s188, 1024, %s190, [#allocation4], 256, 256, 16
    $region21: #{tpu_custom_call.1} parent=1 // pred_fallthru
      _
    // Predicated region
    $region22: #{tpu_custom_call.1} parent=1 // pred_check
      _
    $region23: #{tpu_custom_call.1} parent=1 // pred_check_branch
      %197 = sbr.rel (0) target = $region25
    $region24: #{tpu_custom_call.1} parent=1 // pred_region
      %199 = dma.done [#allocation4], 1024
    $region25: #{tpu_custom_call.1} parent=1 // pred_fallthru
      _
    %200 = vsyncpa [#allocation3], 1
    %201 = vsyncpa [#allocation6], 1
    %202 = vsyncpa [#allocation4], 1

</llo_original>
